<compile_context>
chip_gen: v6e
topology: v6e:2x2x1
jax: 0.10.0
libtpu: 0.0.40
codegen_flags: <defaults>
</compile_context>

<pallas_src>
import functools

import jax
import jax.numpy as jnp
from jax.experimental import pallas as pl
from jax.experimental.pallas import tpu as pltpu


def _lstm_kernel(x_ref, wih_ref, bias_ref, whh_ref, gamma_ref, beta_ref,
                 wd_ref, bd_ref, y_ref, xw_scr, h_scr, c_scr,
                 *, hidden_size, t_chunk, t_total, unroll, mask_tail):
    """One grid step == one (batch_tile, time_chunk).

    Per chunk: one big MXU matmul for the input projection (into VMEM
    scratch), then a partially-unrolled fori_loop over the recurrence carrying
    (h, c) in vregs; h/c only touch VMEM scratch at chunk boundaries."""
    H = hidden_size
    tc = pl.program_id(1)
    b_tile = x_ref.shape[1]

    @pl.when(tc == 0)
    def _init():
        h_scr[...] = jnp.zeros_like(h_scr)
        c_scr[...] = jnp.zeros_like(c_scr)

    # ---- fused input projection for the whole chunk: ONE MXU matmul ----
    # x block is bf16 (halves the HBM stream); accumulate in f32.
    xc = x_ref[...]                                       # (t_chunk, b_tile, I)
    xw = jnp.dot(xc.reshape(t_chunk * b_tile, xc.shape[-1]), wih_ref[...],
                 preferred_element_type=jnp.float32)      # (t_chunk*b_tile, 4H)
    xw_scr[...] = xw.reshape(t_chunk, b_tile, 4 * H) + bias_ref[...][None]

    if mask_tail:
        # Number of real (unpadded) timesteps in this chunk.
        rem = t_total - tc * t_chunk

    def step(s, carry):
        h, c = carry                                      # f32 (b_tile, H)
        # Only the unavoidable recurrent matmul stays on the serial path.
        # W_hh is read from its VMEM ref each step (no hoisted vreg copy).
        gates = xw_scr[s] + jnp.dot(h.astype(jnp.bfloat16), whh_ref[...],
                                    preferred_element_type=jnp.float32)
        # Gate layout permuted to [i | f | o | g]: one wide sigmoid slab,
        # one tanh slab (EUP ops as wide as H allows).
        sig = jax.nn.sigmoid(gates[:, :3 * H])
        g_g = jnp.tanh(gates[:, 3 * H:])
        i_g = sig[:, 0 * H:1 * H]
        f_g = sig[:, 1 * H:2 * H]
        o_g = sig[:, 2 * H:3 * H]
        c_new = f_g * c + i_g * g_g
        h_new = o_g * jnp.tanh(c_new)
        if mask_tail:
            valid = s < rem
            h_new = jnp.where(valid, h_new, h)
            c_new = jnp.where(valid, c_new, c)
        return h_new, c_new

    h, c = jax.lax.fori_loop(0, t_chunk, step, (h_scr[...], c_scr[...]),
                             unroll=unroll)
    h_scr[...] = h
    c_scr[...] = c

    # Only the last timestep is returned by the module, so LayerNorm + Linear
    # are applied to h_T only.
    @pl.when(tc == pl.num_programs(1) - 1)
    def _finalize():
        mu = jnp.mean(h, axis=-1, keepdims=True)
        var = jnp.mean(jnp.square(h - mu), axis=-1, keepdims=True)
        hn = (h - mu) * jax.lax.rsqrt(var + 1e-5)
        hn = hn * gamma_ref[...] + beta_ref[...]
        # Linear(H, 1) as a VPU reduction instead of an N=1 MXU matmul.
        y_ref[...] = jnp.sum(hn * wd_ref[...], axis=-1, keepdims=True) + bd_ref[...]


def _permute_gates(w):
    """Reorder PyTorch LSTM gate blocks [i|f|g|o] -> [i|f|o|g] along axis 0."""
    i, f, g, o = jnp.split(w, 4, axis=0)
    return jnp.concatenate([i, f, o, g], axis=0)


def _choose_tiling(B, T, I, H):
    """Per-generation VMEM budget, batch tile and time-chunk selection."""
    try:
        kind = jax.devices()[0].device_kind.lower()
    except Exception:  # pragma: no cover - defensive
        kind = ""
    is_v7 = "v7" in kind
    is_v5 = "v5" in kind
    if is_v7:
        vmem_limit = 48 * 2**20          # 64 MiB/TC physical minus headroom
        budget = 40 * 2**20
        b_tile_target = 256              # MXU is 2x256x256
    elif is_v5:
        vmem_limit = 96 * 2**20          # 128 MiB physical
        budget = 80 * 2**20
        b_tile_target = 128              # MXU is 4x128x128
    else:                                # v6e and default
        vmem_limit = 96 * 2**20
        budget = 80 * 2**20
        b_tile_target = 256

    # ---- batch tile: pad B to a multiple of 8, unmasked sublanes ----
    b_pad8 = -(-B // 8) * 8
    b_tile = min(b_tile_target, b_pad8)
    b_tile = max(8, (b_tile // 8) * 8)
    # v7x: make sure the "parallel" batch axis spans both TensorCores.
    if is_v7 and (-(-b_pad8 // b_tile)) < 2 and b_tile >= 16:
        b_tile = max(8, ((b_tile // 2) + 7) // 8 * 8)
    B_pad = -(-B // b_tile) * b_tile
    n_bt = B_pad // b_tile

    # ---- time chunk from a VMEM budget formula ----
    bytes_fixed = (H * 4 * H * 2) * 2            # W_hh bf16, double-buffered
    bytes_fixed += 2 * b_tile * H * 4            # h, c scratch
    bytes_fixed += 8 * 4 * H * 4 + 64 * 1024     # small params + headroom
    per_t = b_tile * (4 * H * 4        # xw scratch f32, single-buffered
                      + 2 * I * 2)     # x block bf16, double-buffered
    t_max = max(8, (budget - bytes_fixed) // per_t)
    t_chunk = int(min(t_max, 512, -(-T // 8) * 8))
    t_chunk = max(8, (t_chunk // 8) * 8)
    n_tc = -(-T // t_chunk)
    T_pad = n_tc * t_chunk
    return b_tile, B_pad, n_bt, t_chunk, T_pad, n_tc, vmem_limit


def lstm_forward(x, params):
    """x: (B, T, I) f32 (batch_first, as in PyTorch). Returns ((B, 1), 0, 0)."""
    B, T, I = x.shape
    H = params["w_hh"].shape[1]

    b_tile, B_pad, n_bt, t_chunk, T_pad, n_tc, vmem_limit = _choose_tiling(B, T, I, H)

    # ---- one-time parameter prep (in production this would be cached) ----
    w_ih = _permute_gates(params["w_ih"])                   # (4H, I)
    w_hh = _permute_gates(params["w_hh"])                   # (4H, H)
    bias = _permute_gates(params["b_ih"] + params["b_hh"])  # (4H,)

    wih_t = w_ih.T.astype(jnp.bfloat16)                     # (I, 4H) bf16 for MXU
    whh_t = w_hh.T.astype(jnp.bfloat16)                     # (H, 4H) bf16 for MXU
    bias2 = bias.reshape(1, 4 * H)                          # f32
    gamma = params["gamma"].reshape(1, H)
    beta = params["beta"].reshape(1, H)
    w_d = params["w_d"].reshape(1, H)                        # f32, used on VPU
    b_d = params["b_d"].reshape(1, 1)

    # Time-major x, bf16, padded to (T_pad, B_pad, I). Padded timesteps are
    # masked inside the kernel; padded batch rows are sliced off y.
    x_tm = jnp.transpose(x, (1, 0, 2)).astype(jnp.bfloat16)
    if T_pad != T or B_pad != B:
        x_tm = jnp.pad(x_tm, ((0, T_pad - T), (0, B_pad - B), (0, 0)))

    kernel = functools.partial(
        _lstm_kernel, hidden_size=H, t_chunk=t_chunk, t_total=T,
        unroll=min(8, t_chunk), mask_tail=(T_pad != T))

    y_pad = pl.pallas_call(
        kernel,
        out_shape=jax.ShapeDtypeStruct((B_pad, 1), jnp.float32),
        grid_spec=pltpu.PrefetchScalarGridSpec(
            num_scalar_prefetch=0,
            grid=(n_bt, n_tc),
            in_specs=[
                pl.BlockSpec((t_chunk, b_tile, I), lambda b, t: (t, b, 0)),  # x (bf16)
                pl.BlockSpec((I, 4 * H), lambda b, t: (0, 0)),               # W_ih^T (bf16)
                pl.BlockSpec((1, 4 * H), lambda b, t: (0, 0)),               # b_ih + b_hh
                pl.BlockSpec((H, 4 * H), lambda b, t: (0, 0)),               # W_hh^T (bf16)
                pl.BlockSpec((1, H), lambda b, t: (0, 0)),                   # LN gamma
                pl.BlockSpec((1, H), lambda b, t: (0, 0)),                   # LN beta
                pl.BlockSpec((1, H), lambda b, t: (0, 0)),                   # dense W row
                pl.BlockSpec((1, 1), lambda b, t: (0, 0)),                   # dense b
            ],
            out_specs=pl.BlockSpec((b_tile, 1), lambda b, t: (b, 0)),
            scratch_shapes=[
                pltpu.VMEM((t_chunk, b_tile, 4 * H), jnp.float32),  # xW+b (chunk)
                pltpu.VMEM((b_tile, H), jnp.float32),               # h state
                pltpu.VMEM((b_tile, H), jnp.float32),               # c state
            ],
        ),
        compiler_params=pltpu.CompilerParams(
            # batch tiles independent; time chunks carry h/c -> sequential
            dimension_semantics=("parallel", "arbitrary"),
            vmem_limit_bytes=vmem_limit,
        ),
    )(x_tm, wih_t, bias2, whh_t, gamma, beta, w_d, b_d)

    return y_pad[:B], 0, 0


def make_params(key, input_size, hidden_size):
    """Deterministic synthetic parameters with PyTorch LSTM/LayerNorm/Linear shapes."""
    ks = jax.random.split(key, 8)
    I, H = input_size, hidden_size
    s = 0.2
    return {
        "w_ih": s * jax.random.normal(ks[0], (4 * H, I), jnp.float32),   # weight_ih_l0
        "w_hh": s * jax.random.normal(ks[1], (4 * H, H), jnp.float32),   # weight_hh_l0
        "b_ih": s * jax.random.normal(ks[2], (4 * H,), jnp.float32),
        "b_hh": s * jax.random.normal(ks[3], (4 * H,), jnp.float32),
        "gamma": 1.0 + 0.1 * jax.random.normal(ks[4], (H,), jnp.float32),  # LN weight
        "beta": 0.1 * jax.random.normal(ks[5], (H,), jnp.float32),         # LN bias
        "w_d": s * jax.random.normal(ks[6], (1, H), jnp.float32),          # Linear weight
        "b_d": s * jax.random.normal(ks[7], (1,), jnp.float32),            # Linear bias
    }


def lstm_forward_ref(x, params, matmul_dtype=jnp.float32):
    """Pure-JAX reference (lax.scan LSTM, PyTorch gate order).

    matmul_dtype=bfloat16 mirrors the kernel's bf16 MXU operands (round
    operands to bf16, accumulate in f32), enabling a tight numerical check."""
    B, T, I = x.shape
    H = params["w_hh"].shape[1]
    cast = lambda a: a.astype(matmul_dtype).astype(jnp.float32)
    w_ih_t = params["w_ih"].T                # (I, 4H)
    w_hh_t = params["w_hh"].T                # (H, 4H)
    b = (params["b_ih"] + params["b_hh"])[None, :]

    def step(carry, x_t):
        h, c = carry
        gates = cast(x_t) @ cast(w_ih_t) + cast(h) @ cast(w_hh_t) + b
        i_g = jax.nn.sigmoid(gates[:, 0 * H:1 * H])
        f_g = jax.nn.sigmoid(gates[:, 1 * H:2 * H])
        g_g = jnp.tanh(gates[:, 2 * H:3 * H])
        o_g = jax.nn.sigmoid(gates[:, 3 * H:4 * H])
        c = f_g * c + i_g * g_g
        h = o_g * jnp.tanh(c)
        return (h, c), None

    init = (jnp.zeros((B, H), jnp.float32), jnp.zeros((B, H), jnp.float32))
    (h_last, _), _ = jax.lax.scan(step, init, jnp.transpose(x, (1, 0, 2)))
    mu = jnp.mean(h_last, axis=-1, keepdims=True)
    var = jnp.mean((h_last - mu) ** 2, axis=-1, keepdims=True)
    hn = (h_last - mu) * jax.lax.rsqrt(var + 1e-5)
    hn = hn * params["gamma"][None, :] + params["beta"][None, :]
    return hn @ params["w_d"].T + params["b_d"][None, :]


if __name__ == "__main__":
    B, T, I, H = 2, 8, 4, 32
    key = jax.random.PRNGKey(0)
    k_x, k_p = jax.random.split(key)
    x = jax.random.normal(k_x, (B, T, I), jnp.float32)
    params = make_params(k_p, I, H)

    y, _, _ = jax.jit(lstm_forward)(x, params)
    y = jax.block_until_ready(y)
    assert y.shape == (B, 1)

    # Tight check against a reference that mirrors the kernel's bf16 MXU
    # operands (validates gate order, recurrence, LN and head exactly).
    y_ref_matched = jax.block_until_ready(
        lstm_forward_ref(x, params, matmul_dtype=jnp.bfloat16))
    assert jnp.allclose(y, y_ref_matched, atol=2e-3, rtol=2e-3), (y, y_ref_matched)

    # Looser check against exact f32 (PyTorch) semantics: bounds the precision
    # impact of using bf16 matmul operands.
    y_ref_f32 = jax.block_until_ready(lstm_forward_ref(x, params))
    assert jnp.allclose(y, y_ref_f32, atol=1e-1, rtol=1e-1), (y, y_ref_f32)

    print("KERNEL_OK")
</pallas_src>

<mosaic_0001>
module attributes {stable_mosaic.version = 11 : i64} {
  func.func @_lstm_kernel(%arg0: i32, %arg1: i32, %arg2: memref<8x8x4xbf16, #tpu.memory_space<vmem>>, %arg3: memref<4x128xbf16, #tpu.memory_space<vmem>>, %arg4: memref<1x128xf32, #tpu.memory_space<vmem>>, %arg5: memref<32x128xbf16, #tpu.memory_space<vmem>>, %arg6: memref<1x32xf32, #tpu.memory_space<vmem>>, %arg7: memref<1x32xf32, #tpu.memory_space<vmem>>, %arg8: memref<1x32xf32, #tpu.memory_space<vmem>>, %arg9: memref<1x1xf32, #tpu.memory_space<vmem>>, %arg10: memref<8x1xf32, #tpu.memory_space<vmem>>, %arg11: memref<8x8x128xf32, #tpu.memory_space<vmem>>, %arg12: memref<8x32xf32, #tpu.memory_space<vmem>>, %arg13: memref<8x32xf32, #tpu.memory_space<vmem>>) attributes {dimension_semantics = [#tpu.dimension_semantics<parallel>, #tpu.dimension_semantics<arbitrary>], iteration_bounds = array<i64: 1, 1>, scalar_prefetch = 0 : i64, scratch_operands = 3 : i64, tpu.core_type = #tpu.core_type<tc>, window_params = [{transform_indices = @transform_0, window_bounds = array<i64: 8, 8, 4>}, {pipeline_mode = #tpu.pipeline_mode<synchronous>, transform_indices = @transform_1, window_bounds = array<i64: 4, 128>}, {pipeline_mode = #tpu.pipeline_mode<synchronous>, transform_indices = @transform_2, window_bounds = array<i64: 1, 128>}, {pipeline_mode = #tpu.pipeline_mode<synchronous>, transform_indices = @transform_3, window_bounds = array<i64: 32, 128>}, {pipeline_mode = #tpu.pipeline_mode<synchronous>, transform_indices = @transform_4, window_bounds = array<i64: 1, 32>}, {pipeline_mode = #tpu.pipeline_mode<synchronous>, transform_indices = @transform_5, window_bounds = array<i64: 1, 32>}, {pipeline_mode = #tpu.pipeline_mode<synchronous>, transform_indices = @transform_6, window_bounds = array<i64: 1, 32>}, {pipeline_mode = #tpu.pipeline_mode<synchronous>, transform_indices = @transform_7, window_bounds = array<i64: 1, 1>}, {transform_indices = @transform_8, window_bounds = array<i64: 8, 1>}]} {
    %c0_i32 = arith.constant 0 : i32
    %0 = arith.cmpi eq, %arg1, %c0_i32 : i32
    %1 = arith.extui %0 : i1 to i32
    %c0_i32_0 = arith.constant 0 : i32
    %2 = arith.cmpi ne, %1, %c0_i32_0 : i32
    scf.if %2 {
      %cst_69 = arith.constant 0.000000e+00 : f32
      %204 = vector.broadcast %cst_69 : f32 to vector<8x32xf32>
      %c0_70 = arith.constant 0 : index
      %c0_71 = arith.constant 0 : index
      %205 = vector.load %arg12[%c0_70, %c0_71] : memref<8x32xf32, #tpu.memory_space<vmem>>, vector<8x32xf32>
      tpu.vector_store %arg12[%c0_70, %c0_71], %204 {strides = array<i32>} : memref<8x32xf32, #tpu.memory_space<vmem>>, vector<8x32xf32>,
      %cst_72 = arith.constant 0.000000e+00 : f32
      %206 = vector.broadcast %cst_72 : f32 to vector<8x32xf32>
      %c0_73 = arith.constant 0 : index
      %c0_74 = arith.constant 0 : index
      %207 = vector.load %arg13[%c0_73, %c0_74] : memref<8x32xf32, #tpu.memory_space<vmem>>, vector<8x32xf32>
      tpu.vector_store %arg13[%c0_73, %c0_74], %206 {strides = array<i32>} : memref<8x32xf32, #tpu.memory_space<vmem>>, vector<8x32xf32>,
    } else {
    }
    %c0 = arith.constant 0 : index
    %c0_1 = arith.constant 0 : index
    %c0_2 = arith.constant 0 : index
    %3 = vector.load %arg2[%c0, %c0_1, %c0_2] : memref<8x8x4xbf16, #tpu.memory_space<vmem>>, vector<8x8x4xbf16>
    %4 = vector.shape_cast %3 : vector<8x8x4xbf16> to vector<64x4xbf16>
    %c0_3 = arith.constant 0 : index
    %c0_4 = arith.constant 0 : index
    %5 = vector.load %arg3[%c0_3, %c0_4] : memref<4x128xbf16, #tpu.memory_space<vmem>>, vector<4x128xbf16>
    %cst = arith.constant dense<0.000000e+00> : vector<64x128xf32>
    %6 = tpu.matmul %4, %5, %cst {dimension_numbers = #tpu.dot_dimension_numbers<[1], [0], [0], [1], [0, 0, 1, 1], [], []>} : vector<64x4xbf16>, vector<4x128xbf16>, vector<64x128xf32> -> vector<64x128xf32>
    %7 = vector.shape_cast %6 : vector<64x128xf32> to vector<8x8x128xf32>
    %c0_5 = arith.constant 0 : index
    %c0_6 = arith.constant 0 : index
    %8 = vector.load %arg4[%c0_5, %c0_6] : memref<1x128xf32, #tpu.memory_space<vmem>>, vector<1x128xf32>
    %9 = vector.shape_cast %8 : vector<1x128xf32> to vector<1x1x128xf32>
    %10 = vector.broadcast %9 : vector<1x1x128xf32> to vector<8x8x128xf32>
    %11 = arith.addf %7, %10 : vector<8x8x128xf32>
    %c0_7 = arith.constant 0 : index
    %c0_8 = arith.constant 0 : index
    %c0_9 = arith.constant 0 : index
    %12 = vector.load %arg11[%c0_7, %c0_8, %c0_9] : memref<8x8x128xf32, #tpu.memory_space<vmem>>, vector<8x8x128xf32>
    tpu.vector_store %arg11[%c0_7, %c0_8, %c0_9], %11 {strides = array<i32>} : memref<8x8x128xf32, #tpu.memory_space<vmem>>, vector<8x8x128xf32>,
    %c0_10 = arith.constant 0 : index
    %c0_11 = arith.constant 0 : index
    %13 = vector.load %arg12[%c0_10, %c0_11] : memref<8x32xf32, #tpu.memory_space<vmem>>, vector<8x32xf32>
    %c0_12 = arith.constant 0 : index
    %c0_13 = arith.constant 0 : index
    %14 = vector.load %arg13[%c0_12, %c0_13] : memref<8x32xf32, #tpu.memory_space<vmem>>, vector<8x32xf32>
    %c0_i32_14 = arith.constant 0 : i32
    %15 = arith.index_cast %c0_i32_14 : i32 to index
    %c0_15 = arith.constant 0 : index
    %c0_16 = arith.constant 0 : index
    %16 = vector.load %arg11[%15, %c0_15, %c0_16] : memref<8x8x128xf32, #tpu.memory_space<vmem>>, vector<1x8x128xf32>
    %17 = vector.shape_cast %16 : vector<1x8x128xf32> to vector<8x128xf32>
    %18 = arith.truncf %13 : vector<8x32xf32> to vector<8x32xbf16>
    %c0_17 = arith.constant 0 : index
    %c0_18 = arith.constant 0 : index
    %19 = vector.load %arg5[%c0_17, %c0_18] : memref<32x128xbf16, #tpu.memory_space<vmem>>, vector<32x128xbf16>
    %cst_19 = arith.constant dense<0.000000e+00> : vector<8x128xf32>
    %20 = tpu.matmul %18, %19, %cst_19 {dimension_numbers = #tpu.dot_dimension_numbers<[1], [0], [0], [1], [0, 0, 1, 1], [], []>} : vector<8x32xbf16>, vector<32x128xbf16>, vector<8x128xf32> -> vector<8x128xf32>
    %21 = arith.addf %17, %20 : vector<8x128xf32>
    %22 = vector.extract_strided_slice %21 {offsets = [0, 0], sizes = [8, 96], strides = [1, 1]} : vector<8x128xf32> to vector<8x96xf32>
    %23 = arith.negf %22 : vector<8x96xf32>
    %24 = math.exp %23 : vector<8x96xf32>
    %cst_20 = arith.constant 1.000000e+00 : f32
    %25 = vector.broadcast %cst_20 : f32 to vector<8x96xf32>
    %26 = arith.addf %25, %24 : vector<8x96xf32>
    %27 = arith.divf %25, %26 : vector<8x96xf32>
    %28 = vector.extract_strided_slice %21 {offsets = [0, 96], sizes = [8, 32], strides = [1, 1]} : vector<8x128xf32> to vector<8x32xf32>
    %29 = math.tanh %28 : vector<8x32xf32>
    %30 = vector.extract_strided_slice %27 {offsets = [0, 0], sizes = [8, 32], strides = [1, 1]} : vector<8x96xf32> to vector<8x32xf32>
    %31 = vector.extract_strided_slice %27 {offsets = [0, 32], sizes = [8, 32], strides = [1, 1]} : vector<8x96xf32> to vector<8x32xf32>
    %32 = vector.extract_strided_slice %27 {offsets = [0, 64], sizes = [8, 32], strides = [1, 1]} : vector<8x96xf32> to vector<8x32xf32>
    %33 = arith.mulf %31, %14 : vector<8x32xf32>
    %34 = arith.mulf %30, %29 : vector<8x32xf32>
    %35 = arith.addf %33, %34 : vector<8x32xf32>
    %36 = math.tanh %35 : vector<8x32xf32>
    %37 = arith.mulf %32, %36 : vector<8x32xf32>
    %c1_i32 = arith.constant 1 : i32
    %38 = arith.index_cast %c1_i32 : i32 to index
    %c0_21 = arith.constant 0 : index
    %c0_22 = arith.constant 0 : index
    %39 = vector.load %arg11[%38, %c0_21, %c0_22] : memref<8x8x128xf32, #tpu.memory_space<vmem>>, vector<1x8x128xf32>
    %40 = vector.shape_cast %39 : vector<1x8x128xf32> to vector<8x128xf32>
    %41 = arith.truncf %37 : vector<8x32xf32> to vector<8x32xbf16>
    %c0_23 = arith.constant 0 : index
    %c0_24 = arith.constant 0 : index
    %42 = vector.load %arg5[%c0_23, %c0_24] : memref<32x128xbf16, #tpu.memory_space<vmem>>, vector<32x128xbf16>
    %cst_25 = arith.constant dense<0.000000e+00> : vector<8x128xf32>
    %43 = tpu.matmul %41, %42, %cst_25 {dimension_numbers = #tpu.dot_dimension_numbers<[1], [0], [0], [1], [0, 0, 1, 1], [], []>} : vector<8x32xbf16>, vector<32x128xbf16>, vector<8x128xf32> -> vector<8x128xf32>
    %44 = arith.addf %40, %43 : vector<8x128xf32>
    %45 = vector.extract_strided_slice %44 {offsets = [0, 0], sizes = [8, 96], strides = [1, 1]} : vector<8x128xf32> to vector<8x96xf32>
    %46 = arith.negf %45 : vector<8x96xf32>
    %47 = math.exp %46 : vector<8x96xf32>
    %cst_26 = arith.constant 1.000000e+00 : f32
    %48 = vector.broadcast %cst_26 : f32 to vector<8x96xf32>
    %49 = arith.addf %48, %47 : vector<8x96xf32>
    %50 = arith.divf %48, %49 : vector<8x96xf32>
    %51 = vector.extract_strided_slice %44 {offsets = [0, 96], sizes = [8, 32], strides = [1, 1]} : vector<8x128xf32> to vector<8x32xf32>
    %52 = math.tanh %51 : vector<8x32xf32>
    %53 = vector.extract_strided_slice %50 {offsets = [0, 0], sizes = [8, 32], strides = [1, 1]} : vector<8x96xf32> to vector<8x32xf32>
    %54 = vector.extract_strided_slice %50 {offsets = [0, 32], sizes = [8, 32], strides = [1, 1]} : vector<8x96xf32> to vector<8x32xf32>
    %55 = vector.extract_strided_slice %50 {offsets = [0, 64], sizes = [8, 32], strides = [1, 1]} : vector<8x96xf32> to vector<8x32xf32>
    %56 = arith.mulf %54, %35 : vector<8x32xf32>
    %57 = arith.mulf %53, %52 : vector<8x32xf32>
    %58 = arith.addf %56, %57 : vector<8x32xf32>
    %59 = math.tanh %58 : vector<8x32xf32>
    %60 = arith.mulf %55, %59 : vector<8x32xf32>
    %c2_i32 = arith.constant 2 : i32
    %61 = arith.index_cast %c2_i32 : i32 to index
    %c0_27 = arith.constant 0 : index
    %c0_28 = arith.constant 0 : index
    %62 = vector.load %arg11[%61, %c0_27, %c0_28] : memref<8x8x128xf32, #tpu.memory_space<vmem>>, vector<1x8x128xf32>
    %63 = vector.shape_cast %62 : vector<1x8x128xf32> to vector<8x128xf32>
    %64 = arith.truncf %60 : vector<8x32xf32> to vector<8x32xbf16>
    %c0_29 = arith.constant 0 : index
    %c0_30 = arith.constant 0 : index
    %65 = vector.load %arg5[%c0_29, %c0_30] : memref<32x128xbf16, #tpu.memory_space<vmem>>, vector<32x128xbf16>
    %cst_31 = arith.constant dense<0.000000e+00> : vector<8x128xf32>
    %66 = tpu.matmul %64, %65, %cst_31 {dimension_numbers = #tpu.dot_dimension_numbers<[1], [0], [0], [1], [0, 0, 1, 1], [], []>} : vector<8x32xbf16>, vector<32x128xbf16>, vector<8x128xf32> -> vector<8x128xf32>
    %67 = arith.addf %63, %66 : vector<8x128xf32>
    %68 = vector.extract_strided_slice %67 {offsets = [0, 0], sizes = [8, 96], strides = [1, 1]} : vector<8x128xf32> to vector<8x96xf32>
    %69 = arith.negf %68 : vector<8x96xf32>
    %70 = math.exp %69 : vector<8x96xf32>
    %cst_32 = arith.constant 1.000000e+00 : f32
    %71 = vector.broadcast %cst_32 : f32 to vector<8x96xf32>
    %72 = arith.addf %71, %70 : vector<8x96xf32>
    %73 = arith.divf %71, %72 : vector<8x96xf32>
    %74 = vector.extract_strided_slice %67 {offsets = [0, 96], sizes = [8, 32], strides = [1, 1]} : vector<8x128xf32> to vector<8x32xf32>
    %75 = math.tanh %74 : vector<8x32xf32>
    %76 = vector.extract_strided_slice %73 {offsets = [0, 0], sizes = [8, 32], strides = [1, 1]} : vector<8x96xf32> to vector<8x32xf32>
    %77 = vector.extract_strided_slice %73 {offsets = [0, 32], sizes = [8, 32], strides = [1, 1]} : vector<8x96xf32> to vector<8x32xf32>
    %78 = vector.extract_strided_slice %73 {offsets = [0, 64], sizes = [8, 32], strides = [1, 1]} : vector<8x96xf32> to vector<8x32xf32>
    %79 = arith.mulf %77, %58 : vector<8x32xf32>
    %80 = arith.mulf %76, %75 : vector<8x32xf32>
    %81 = arith.addf %79, %80 : vector<8x32xf32>
    %82 = math.tanh %81 : vector<8x32xf32>
    %83 = arith.mulf %78, %82 : vector<8x32xf32>
    %c3_i32 = arith.constant 3 : i32
    %84 = arith.index_cast %c3_i32 : i32 to index
    %c0_33 = arith.constant 0 : index
    %c0_34 = arith.constant 0 : index
    %85 = vector.load %arg11[%84, %c0_33, %c0_34] : memref<8x8x128xf32, #tpu.memory_space<vmem>>, vector<1x8x128xf32>
    %86 = vector.shape_cast %85 : vector<1x8x128xf32> to vector<8x128xf32>
    %87 = arith.truncf %83 : vector<8x32xf32> to vector<8x32xbf16>
    %c0_35 = arith.constant 0 : index
    %c0_36 = arith.constant 0 : index
    %88 = vector.load %arg5[%c0_35, %c0_36] : memref<32x128xbf16, #tpu.memory_space<vmem>>, vector<32x128xbf16>
    %cst_37 = arith.constant dense<0.000000e+00> : vector<8x128xf32>
    %89 = tpu.matmul %87, %88, %cst_37 {dimension_numbers = #tpu.dot_dimension_numbers<[1], [0], [0], [1], [0, 0, 1, 1], [], []>} : vector<8x32xbf16>, vector<32x128xbf16>, vector<8x128xf32> -> vector<8x128xf32>
    %90 = arith.addf %86, %89 : vector<8x128xf32>
    %91 = vector.extract_strided_slice %90 {offsets = [0, 0], sizes = [8, 96], strides = [1, 1]} : vector<8x128xf32> to vector<8x96xf32>
    %92 = arith.negf %91 : vector<8x96xf32>
    %93 = math.exp %92 : vector<8x96xf32>
    %cst_38 = arith.constant 1.000000e+00 : f32
    %94 = vector.broadcast %cst_38 : f32 to vector<8x96xf32>
    %95 = arith.addf %94, %93 : vector<8x96xf32>
    %96 = arith.divf %94, %95 : vector<8x96xf32>
    %97 = vector.extract_strided_slice %90 {offsets = [0, 96], sizes = [8, 32], strides = [1, 1]} : vector<8x128xf32> to vector<8x32xf32>
    %98 = math.tanh %97 : vector<8x32xf32>
    %99 = vector.extract_strided_slice %96 {offsets = [0, 0], sizes = [8, 32], strides = [1, 1]} : vector<8x96xf32> to vector<8x32xf32>
    %100 = vector.extract_strided_slice %96 {offsets = [0, 32], sizes = [8, 32], strides = [1, 1]} : vector<8x96xf32> to vector<8x32xf32>
    %101 = vector.extract_strided_slice %96 {offsets = [0, 64], sizes = [8, 32], strides = [1, 1]} : vector<8x96xf32> to vector<8x32xf32>
    %102 = arith.mulf %100, %81 : vector<8x32xf32>
    %103 = arith.mulf %99, %98 : vector<8x32xf32>
    %104 = arith.addf %102, %103 : vector<8x32xf32>
    %105 = math.tanh %104 : vector<8x32xf32>
    %106 = arith.mulf %101, %105 : vector<8x32xf32>
    %c4_i32 = arith.constant 4 : i32
    %107 = arith.index_cast %c4_i32 : i32 to index
    %c0_39 = arith.constant 0 : index
    %c0_40 = arith.constant 0 : index
    %108 = vector.load %arg11[%107, %c0_39, %c0_40] : memref<8x8x128xf32, #tpu.memory_space<vmem>>, vector<1x8x128xf32>
    %109 = vector.shape_cast %108 : vector<1x8x128xf32> to vector<8x128xf32>
    %110 = arith.truncf %106 : vector<8x32xf32> to vector<8x32xbf16>
    %c0_41 = arith.constant 0 : index
    %c0_42 = arith.constant 0 : index
    %111 = vector.load %arg5[%c0_41, %c0_42] : memref<32x128xbf16, #tpu.memory_space<vmem>>, vector<32x128xbf16>
    %cst_43 = arith.constant dense<0.000000e+00> : vector<8x128xf32>
    %112 = tpu.matmul %110, %111, %cst_43 {dimension_numbers = #tpu.dot_dimension_numbers<[1], [0], [0], [1], [0, 0, 1, 1], [], []>} : vector<8x32xbf16>, vector<32x128xbf16>, vector<8x128xf32> -> vector<8x128xf32>
    %113 = arith.addf %109, %112 : vector<8x128xf32>
    %114 = vector.extract_strided_slice %113 {offsets = [0, 0], sizes = [8, 96], strides = [1, 1]} : vector<8x128xf32> to vector<8x96xf32>
    %115 = arith.negf %114 : vector<8x96xf32>
    %116 = math.exp %115 : vector<8x96xf32>
    %cst_44 = arith.constant 1.000000e+00 : f32
    %117 = vector.broadcast %cst_44 : f32 to vector<8x96xf32>
    %118 = arith.addf %117, %116 : vector<8x96xf32>
    %119 = arith.divf %117, %118 : vector<8x96xf32>
    %120 = vector.extract_strided_slice %113 {offsets = [0, 96], sizes = [8, 32], strides = [1, 1]} : vector<8x128xf32> to vector<8x32xf32>
    %121 = math.tanh %120 : vector<8x32xf32>
    %122 = vector.extract_strided_slice %119 {offsets = [0, 0], sizes = [8, 32], strides = [1, 1]} : vector<8x96xf32> to vector<8x32xf32>
    %123 = vector.extract_strided_slice %119 {offsets = [0, 32], sizes = [8, 32], strides = [1, 1]} : vector<8x96xf32> to vector<8x32xf32>
    %124 = vector.extract_strided_slice %119 {offsets = [0, 64], sizes = [8, 32], strides = [1, 1]} : vector<8x96xf32> to vector<8x32xf32>
    %125 = arith.mulf %123, %104 : vector<8x32xf32>
    %126 = arith.mulf %122, %121 : vector<8x32xf32>
    %127 = arith.addf %125, %126 : vector<8x32xf32>
    %128 = math.tanh %127 : vector<8x32xf32>
    %129 = arith.mulf %124, %128 : vector<8x32xf32>
    %c5_i32 = arith.constant 5 : i32
    %130 = arith.index_cast %c5_i32 : i32 to index
    %c0_45 = arith.constant 0 : index
    %c0_46 = arith.constant 0 : index
    %131 = vector.load %arg11[%130, %c0_45, %c0_46] : memref<8x8x128xf32, #tpu.memory_space<vmem>>, vector<1x8x128xf32>
    %132 = vector.shape_cast %131 : vector<1x8x128xf32> to vector<8x128xf32>
    %133 = arith.truncf %129 : vector<8x32xf32> to vector<8x32xbf16>
    %c0_47 = arith.constant 0 : index
    %c0_48 = arith.constant 0 : index
    %134 = vector.load %arg5[%c0_47, %c0_48] : memref<32x128xbf16, #tpu.memory_space<vmem>>, vector<32x128xbf16>
    %cst_49 = arith.constant dense<0.000000e+00> : vector<8x128xf32>
    %135 = tpu.matmul %133, %134, %cst_49 {dimension_numbers = #tpu.dot_dimension_numbers<[1], [0], [0], [1], [0, 0, 1, 1], [], []>} : vector<8x32xbf16>, vector<32x128xbf16>, vector<8x128xf32> -> vector<8x128xf32>
    %136 = arith.addf %132, %135 : vector<8x128xf32>
    %137 = vector.extract_strided_slice %136 {offsets = [0, 0], sizes = [8, 96], strides = [1, 1]} : vector<8x128xf32> to vector<8x96xf32>
    %138 = arith.negf %137 : vector<8x96xf32>
    %139 = math.exp %138 : vector<8x96xf32>
    %cst_50 = arith.constant 1.000000e+00 : f32
    %140 = vector.broadcast %cst_50 : f32 to vector<8x96xf32>
    %141 = arith.addf %140, %139 : vector<8x96xf32>
    %142 = arith.divf %140, %141 : vector<8x96xf32>
    %143 = vector.extract_strided_slice %136 {offsets = [0, 96], sizes = [8, 32], strides = [1, 1]} : vector<8x128xf32> to vector<8x32xf32>
    %144 = math.tanh %143 : vector<8x32xf32>
    %145 = vector.extract_strided_slice %142 {offsets = [0, 0], sizes = [8, 32], strides = [1, 1]} : vector<8x96xf32> to vector<8x32xf32>
    %146 = vector.extract_strided_slice %142 {offsets = [0, 32], sizes = [8, 32], strides = [1, 1]} : vector<8x96xf32> to vector<8x32xf32>
    %147 = vector.extract_strided_slice %142 {offsets = [0, 64], sizes = [8, 32], strides = [1, 1]} : vector<8x96xf32> to vector<8x32xf32>
    %148 = arith.mulf %146, %127 : vector<8x32xf32>
    %149 = arith.mulf %145, %144 : vector<8x32xf32>
    %150 = arith.addf %148, %149 : vector<8x32xf32>
    %151 = math.tanh %150 : vector<8x32xf32>
    %152 = arith.mulf %147, %151 : vector<8x32xf32>
    %c6_i32 = arith.constant 6 : i32
    %153 = arith.index_cast %c6_i32 : i32 to index
    %c0_51 = arith.constant 0 : index
    %c0_52 = arith.constant 0 : index
    %154 = vector.load %arg11[%153, %c0_51, %c0_52] : memref<8x8x128xf32, #tpu.memory_space<vmem>>, vector<1x8x128xf32>
    %155 = vector.shape_cast %154 : vector<1x8x128xf32> to vector<8x128xf32>
    %156 = arith.truncf %152 : vector<8x32xf32> to vector<8x32xbf16>
    %c0_53 = arith.constant 0 : index
    %c0_54 = arith.constant 0 : index
    %157 = vector.load %arg5[%c0_53, %c0_54] : memref<32x128xbf16, #tpu.memory_space<vmem>>, vector<32x128xbf16>
    %cst_55 = arith.constant dense<0.000000e+00> : vector<8x128xf32>
    %158 = tpu.matmul %156, %157, %cst_55 {dimension_numbers = #tpu.dot_dimension_numbers<[1], [0], [0], [1], [0, 0, 1, 1], [], []>} : vector<8x32xbf16>, vector<32x128xbf16>, vector<8x128xf32> -> vector<8x128xf32>
    %159 = arith.addf %155, %158 : vector<8x128xf32>
    %160 = vector.extract_strided_slice %159 {offsets = [0, 0], sizes = [8, 96], strides = [1, 1]} : vector<8x128xf32> to vector<8x96xf32>
    %161 = arith.negf %160 : vector<8x96xf32>
    %162 = math.exp %161 : vector<8x96xf32>
    %cst_56 = arith.constant 1.000000e+00 : f32
    %163 = vector.broadcast %cst_56 : f32 to vector<8x96xf32>
    %164 = arith.addf %163, %162 : vector<8x96xf32>
    %165 = arith.divf %163, %164 : vector<8x96xf32>
    %166 = vector.extract_strided_slice %159 {offsets = [0, 96], sizes = [8, 32], strides = [1, 1]} : vector<8x128xf32> to vector<8x32xf32>
    %167 = math.tanh %166 : vector<8x32xf32>
    %168 = vector.extract_strided_slice %165 {offsets = [0, 0], sizes = [8, 32], strides = [1, 1]} : vector<8x96xf32> to vector<8x32xf32>
    %169 = vector.extract_strided_slice %165 {offsets = [0, 32], sizes = [8, 32], strides = [1, 1]} : vector<8x96xf32> to vector<8x32xf32>
    %170 = vector.extract_strided_slice %165 {offsets = [0, 64], sizes = [8, 32], strides = [1, 1]} : vector<8x96xf32> to vector<8x32xf32>
    %171 = arith.mulf %169, %150 : vector<8x32xf32>
    %172 = arith.mulf %168, %167 : vector<8x32xf32>
    %173 = arith.addf %171, %172 : vector<8x32xf32>
    %174 = math.tanh %173 : vector<8x32xf32>
    %175 = arith.mulf %170, %174 : vector<8x32xf32>
    %c7_i32 = arith.constant 7 : i32
    %176 = arith.index_cast %c7_i32 : i32 to index
    %c0_57 = arith.constant 0 : index
    %c0_58 = arith.constant 0 : index
    %177 = vector.load %arg11[%176, %c0_57, %c0_58] : memref<8x8x128xf32, #tpu.memory_space<vmem>>, vector<1x8x128xf32>
    %178 = vector.shape_cast %177 : vector<1x8x128xf32> to vector<8x128xf32>
    %179 = arith.truncf %175 : vector<8x32xf32> to vector<8x32xbf16>
    %c0_59 = arith.constant 0 : index
    %c0_60 = arith.constant 0 : index
    %180 = vector.load %arg5[%c0_59, %c0_60] : memref<32x128xbf16, #tpu.memory_space<vmem>>, vector<32x128xbf16>
    %cst_61 = arith.constant dense<0.000000e+00> : vector<8x128xf32>
    %181 = tpu.matmul %179, %180, %cst_61 {dimension_numbers = #tpu.dot_dimension_numbers<[1], [0], [0], [1], [0, 0, 1, 1], [], []>} : vector<8x32xbf16>, vector<32x128xbf16>, vector<8x128xf32> -> vector<8x128xf32>
    %182 = arith.addf %178, %181 : vector<8x128xf32>
    %183 = vector.extract_strided_slice %182 {offsets = [0, 0], sizes = [8, 96], strides = [1, 1]} : vector<8x128xf32> to vector<8x96xf32>
    %184 = arith.negf %183 : vector<8x96xf32>
    %185 = math.exp %184 : vector<8x96xf32>
    %cst_62 = arith.constant 1.000000e+00 : f32
    %186 = vector.broadcast %cst_62 : f32 to vector<8x96xf32>
    %187 = arith.addf %186, %185 : vector<8x96xf32>
    %188 = arith.divf %186, %187 : vector<8x96xf32>
    %189 = vector.extract_strided_slice %182 {offsets = [0, 96], sizes = [8, 32], strides = [1, 1]} : vector<8x128xf32> to vector<8x32xf32>
    %190 = math.tanh %189 : vector<8x32xf32>
    %191 = vector.extract_strided_slice %188 {offsets = [0, 0], sizes = [8, 32], strides = [1, 1]} : vector<8x96xf32> to vector<8x32xf32>
    %192 = vector.extract_strided_slice %188 {offsets = [0, 32], sizes = [8, 32], strides = [1, 1]} : vector<8x96xf32> to vector<8x32xf32>
    %193 = vector.extract_strided_slice %188 {offsets = [0, 64], sizes = [8, 32], strides = [1, 1]} : vector<8x96xf32> to vector<8x32xf32>
    %194 = arith.mulf %192, %173 : vector<8x32xf32>
    %195 = arith.mulf %191, %190 : vector<8x32xf32>
    %196 = arith.addf %194, %195 : vector<8x32xf32>
    %197 = math.tanh %196 : vector<8x32xf32>
    %198 = arith.mulf %193, %197 : vector<8x32xf32>
    %c8_i32 = arith.constant 8 : i32
    %c0_63 = arith.constant 0 : index
    %c0_64 = arith.constant 0 : index
    %199 = vector.load %arg12[%c0_63, %c0_64] : memref<8x32xf32, #tpu.memory_space<vmem>>, vector<8x32xf32>
    tpu.vector_store %arg12[%c0_63, %c0_64], %198 {strides = array<i32>} : memref<8x32xf32, #tpu.memory_space<vmem>>, vector<8x32xf32>,
    %c0_65 = arith.constant 0 : index
    %c0_66 = arith.constant 0 : index
    %200 = vector.load %arg13[%c0_65, %c0_66] : memref<8x32xf32, #tpu.memory_space<vmem>>, vector<8x32xf32>
    tpu.vector_store %arg13[%c0_65, %c0_66], %196 {strides = array<i32>} : memref<8x32xf32, #tpu.memory_space<vmem>>, vector<8x32xf32>,
    %c0_i32_67 = arith.constant 0 : i32
    %201 = arith.cmpi eq, %arg1, %c0_i32_67 : i32
    %202 = arith.extui %201 : i1 to i32
    %c0_i32_68 = arith.constant 0 : i32
    %203 = arith.cmpi ne, %202, %c0_i32_68 : i32
    scf.if %203 {
      %cst_69 = arith.constant dense<0.000000e+00> : vector<8xf32>
      %204 = vector.multi_reduction <add>, %198, %cst_69 [1] : vector<8x32xf32> to vector<8xf32>
      %205 = vector.shape_cast %204 : vector<8xf32> to vector<8x1xf32>
      %cst_70 = arith.constant 3.200000e+01 : f32
      %206 = vector.broadcast %cst_70 : f32 to vector<8x1xf32>
      %207 = arith.divf %205, %206 : vector<8x1xf32>
      %208 = vector.broadcast %207 : vector<8x1xf32> to vector<8x32xf32>
      %209 = arith.subf %198, %208 : vector<8x32xf32>
      %210 = arith.mulf %209, %209 : vector<8x32xf32>
      %cst_71 = arith.constant dense<0.000000e+00> : vector<8xf32>
      %211 = vector.multi_reduction <add>, %210, %cst_71 [1] : vector<8x32xf32> to vector<8xf32>
      %212 = vector.shape_cast %211 : vector<8xf32> to vector<8x1xf32>
      %cst_72 = arith.constant 3.200000e+01 : f32
      %213 = vector.broadcast %cst_72 : f32 to vector<8x1xf32>
      %214 = arith.divf %212, %213 : vector<8x1xf32>
      %215 = vector.broadcast %207 : vector<8x1xf32> to vector<8x32xf32>
      %216 = arith.subf %198, %215 : vector<8x32xf32>
      %cst_73 = arith.constant 9.99999974E-6 : f32
      %217 = vector.broadcast %cst_73 : f32 to vector<8x1xf32>
      %218 = arith.addf %214, %217 : vector<8x1xf32>
      %219 = math.rsqrt %218 : vector<8x1xf32>
      %220 = vector.broadcast %219 : vector<8x1xf32> to vector<8x32xf32>
      %221 = arith.mulf %216, %220 : vector<8x32xf32>
      %c0_74 = arith.constant 0 : index
      %c0_75 = arith.constant 0 : index
      %222 = vector.load %arg6[%c0_74, %c0_75] : memref<1x32xf32, #tpu.memory_space<vmem>>, vector<1x32xf32>
      %223 = vector.broadcast %222 : vector<1x32xf32> to vector<8x32xf32>
      %224 = arith.mulf %221, %223 : vector<8x32xf32>
      %c0_76 = arith.constant 0 : index
      %c0_77 = arith.constant 0 : index
      %225 = vector.load %arg7[%c0_76, %c0_77] : memref<1x32xf32, #tpu.memory_space<vmem>>, vector<1x32xf32>
      %226 = vector.broadcast %225 : vector<1x32xf32> to vector<8x32xf32>
      %227 = arith.addf %224, %226 : vector<8x32xf32>
      %c0_78 = arith.constant 0 : index
      %c0_79 = arith.constant 0 : index
      %228 = vector.load %arg8[%c0_78, %c0_79] : memref<1x32xf32, #tpu.memory_space<vmem>>, vector<1x32xf32>
      %229 = vector.broadcast %228 : vector<1x32xf32> to vector<8x32xf32>
      %230 = arith.mulf %227, %229 : vector<8x32xf32>
      %cst_80 = arith.constant dense<0.000000e+00> : vector<8xf32>
      %231 = vector.multi_reduction <add>, %230, %cst_80 [1] : vector<8x32xf32> to vector<8xf32>
      %232 = vector.shape_cast %231 : vector<8xf32> to vector<8x1xf32>
      %c0_81 = arith.constant 0 : index
      %c0_82 = arith.constant 0 : index
      %233 = vector.load %arg9[%c0_81, %c0_82] : memref<1x1xf32, #tpu.memory_space<vmem>>, vector<1x1xf32>
      %234 = vector.broadcast %233 : vector<1x1xf32> to vector<8x1xf32>
      %235 = arith.addf %232, %234 : vector<8x1xf32>
      %c0_83 = arith.constant 0 : index
      %c0_84 = arith.constant 0 : index
      %236 = vector.load %arg10[%c0_83, %c0_84] : memref<8x1xf32, #tpu.memory_space<vmem>>, vector<8x1xf32>
      tpu.vector_store %arg10[%c0_83, %c0_84], %235 {strides = array<i32>} : memref<8x1xf32, #tpu.memory_space<vmem>>, vector<8x1xf32>,
    } else {
    }
    return
  }
  func.func @transform_0(%arg0: i32, %arg1: i32) -> (i32, i32, i32) {
    %c0_i32 = arith.constant 0 : i32
    %c0_i32_0 = arith.constant 0 : i32
    return %arg1, %arg0, %c0_i32 : i32, i32, i32
  }
  func.func @transform_1(%arg0: i32, %arg1: i32) -> (i32, i32) {
    %c0_i32 = arith.constant 0 : i32
    %c0_i32_0 = arith.constant 0 : i32
    %c0_i32_1 = arith.constant 0 : i32
    return %c0_i32, %c0_i32_0 : i32, i32
  }
  func.func @transform_2(%arg0: i32, %arg1: i32) -> (i32, i32) {
    %c0_i32 = arith.constant 0 : i32
    %c0_i32_0 = arith.constant 0 : i32
    %c0_i32_1 = arith.constant 0 : i32
    return %c0_i32, %c0_i32_0 : i32, i32
  }
  func.func @transform_3(%arg0: i32, %arg1: i32) -> (i32, i32) {
    %c0_i32 = arith.constant 0 : i32
    %c0_i32_0 = arith.constant 0 : i32
    %c0_i32_1 = arith.constant 0 : i32
    return %c0_i32, %c0_i32_0 : i32, i32
  }
  func.func @transform_4(%arg0: i32, %arg1: i32) -> (i32, i32) {
    %c0_i32 = arith.constant 0 : i32
    %c0_i32_0 = arith.constant 0 : i32
    %c0_i32_1 = arith.constant 0 : i32
    return %c0_i32, %c0_i32_0 : i32, i32
  }
  func.func @transform_5(%arg0: i32, %arg1: i32) -> (i32, i32) {
    %c0_i32 = arith.constant 0 : i32
    %c0_i32_0 = arith.constant 0 : i32
    %c0_i32_1 = arith.constant 0 : i32
    return %c0_i32, %c0_i32_0 : i32, i32
  }
  func.func @transform_6(%arg0: i32, %arg1: i32) -> (i32, i32) {
    %c0_i32 = arith.constant 0 : i32
    %c0_i32_0 = arith.constant 0 : i32
    %c0_i32_1 = arith.constant 0 : i32
    return %c0_i32, %c0_i32_0 : i32, i32
  }
  func.func @transform_7(%arg0: i32, %arg1: i32) -> (i32, i32) {
    %c0_i32 = arith.constant 0 : i32
    %c0_i32_0 = arith.constant 0 : i32
    %c0_i32_1 = arith.constant 0 : i32
    return %c0_i32, %c0_i32_0 : i32, i32
  }
  func.func @transform_8(%arg0: i32, %arg1: i32) -> (i32, i32) {
    %c0_i32 = arith.constant 0 : i32
    %c0_i32_0 = arith.constant 0 : i32
    return %arg0, %c0_i32 : i32, i32
  }
}

</mosaic_0001>

<llo_original>
// kernel: lstm_forward.1
$region0: #{lstm_forward.1}
  #allocation0 [shape = 'u32[]', space=smem, size = 0x4, offset = 0x4, fixed_abs, tag = 'smem constant byte address 0x4 - core index']
  #allocation1 [shape = 'u32[144,128]{1,0:T(1,128)}', space=vmem, size = 0x12000, scoped, tag = 'internal scratch']
  #allocation2 [shape = 'f32[8,8,128]{2,1,0:T(8,128)}', space=vmem, size = 0x8000, scoped, tag = 'scratch operand']
  #allocation3 [shape = 'f32[8,32]{1,0:T(8,128)}', space=vmem, size = 0x1000, scoped, tag = 'scratch operand']
  #allocation4 [shape = 'f32[8,32]{1,0:T(8,128)}', space=vmem, size = 0x1000, scoped, tag = 'scratch operand']
  #allocation5 [shape = 'f32[1,1]{1,0:T(1,128)S(1)}', space=vmem, size = 0x200, scoped, tag = 'scoped memory for lstm_forward.1']
  %s0 = inlined_call_operand.vmem [shape: bf16[8,8,4], index: 0, kind: input, shape index: {}]
  %s1 = inlined_call_operand.vmem [shape: bf16[4,128], index: 1, kind: input, shape index: {}]
  %s2 = inlined_call_operand.vmem [shape: f32[1,128], index: 2, kind: input, shape index: {}]
  %s3 = inlined_call_operand.vmem [shape: bf16[32,128], index: 3, kind: input, shape index: {}]
  %s4 = inlined_call_operand.vmem [shape: f32[1,32], index: 4, kind: input, shape index: {}]
  %s5 = inlined_call_operand.vmem [shape: f32[1,32], index: 5, kind: input, shape index: {}]
  %s6 = inlined_call_operand.vmem [shape: f32[1,32], index: 6, kind: input, shape index: {}]
  %s7 = inlined_call_operand.<no memory space> [shape: f32[1,1], index: 7, kind: input, shape index: {}]
  %s8 = inlined_call_operand.vmem [shape: f32[8,1], index: 8, kind: output, shape index: {}]
  %s9 = sld [smem:[#allocation0]]
  $region50: #{lstm_forward.1} parent=0
    _
  %s11 = ssub.s32 1, %s9
  %s12 = scalar_select 0, %s11, %s9
  %v13 = vstv %s7
  %14 = vst [vmem:[#allocation5] sm:$0x1] %v13
  // Predicated region
  $region2: #{lstm_forward.1} parent=0 // pred_check
    _
  $region3: #{lstm_forward.1} parent=0 // pred_check_branch
    %16 = sbr.rel (0) target = $region5
  $region4: #{lstm_forward.1} parent=0 // pred_region
    _
  $region5: #{lstm_forward.1} parent=0 // pred_fallthru
    _
  // Predicated region
  $region6: #{lstm_forward.1} parent=0 // pred_check
    _
  $region7: #{lstm_forward.1} parent=0 // pred_check_branch
    %18 = sbr.rel (0) target = $region9
  $region8: #{lstm_forward.1} parent=0 // pred_region
    _
  $region9: #{lstm_forward.1} parent=0 // pred_fallthru
    _
  // Predicated region
  $region10: #{lstm_forward.1} parent=0 // pred_check
    _
  $region11: #{lstm_forward.1} parent=0 // pred_check_branch
    %20 = sbr.rel (0) target = $region13
  $region12: #{lstm_forward.1} parent=0 // pred_region
    _
  $region13: #{lstm_forward.1} parent=0 // pred_fallthru
    _
  // Predicated region
  $region14: #{lstm_forward.1} parent=0 // pred_check
    _
  $region15: #{lstm_forward.1} parent=0 // pred_check_branch
    %22 = sbr.rel (0) target = $region17
  $region16: #{lstm_forward.1} parent=0 // pred_region
    _
  $region17: #{lstm_forward.1} parent=0 // pred_fallthru
    _
  // Predicated region
  $region18: #{lstm_forward.1} parent=0 // pred_check
    _
  $region19: #{lstm_forward.1} parent=0 // pred_check_branch
    %24 = sbr.rel (0) target = $region21
  $region20: #{lstm_forward.1} parent=0 // pred_region
    _
  $region21: #{lstm_forward.1} parent=0 // pred_fallthru
    _
  // Predicated region
  $region22: #{lstm_forward.1} parent=0 // pred_check
    _
  $region23: #{lstm_forward.1} parent=0 // pred_check_branch
    %26 = sbr.rel (0) target = $region25
  $region24: #{lstm_forward.1} parent=0 // pred_region
    _
  $region25: #{lstm_forward.1} parent=0 // pred_fallthru
    _
  // Predicated region
  $region26: #{lstm_forward.1} parent=0 // pred_check
    _
  $region27: #{lstm_forward.1} parent=0 // pred_check_branch
    %28 = sbr.rel (0) target = $region29
  $region28: #{lstm_forward.1} parent=0 // pred_region
    _
  $region29: #{lstm_forward.1} parent=0 // pred_fallthru
    _
  // Predicated region
  $region30: #{lstm_forward.1} parent=0 // pred_check
    _
  $region31: #{lstm_forward.1} parent=0 // pred_check_branch
    %30 = sbr.rel (0) target = $region33
  $region32: #{lstm_forward.1} parent=0 // pred_region
    _
  $region33: #{lstm_forward.1} parent=0 // pred_fallthru
    _
  %p32 = scmp.eq.s32.totalorder 0, 0
  // Predicated region
  $region34: #{lstm_forward.1} parent=0 // pred_check
    %p33 = pneg %p32
  $region35: #{lstm_forward.1} parent=0 // pred_check_branch
    %35 = sbr.rel (%p33) target = $region37
  $region36: #{lstm_forward.1} parent=0 // pred_region
    %vm36 = vcmask 261120
    %37 = vst.msk [vmem:[#allocation3] sm:$0xff] %vm36, 0.0
    %38 = vst.msk [vmem:[#allocation4] sm:$0xff] %vm36, 0.0
  $region37: #{lstm_forward.1} parent=0 // pred_fallthru
    _
  %v39 = vld [vmem:[%s0] sm:$0xf]
  %v40 = vld [vmem:[%s0 + $0x4] sm:$0xf]
  %v41 = vld [vmem:[%s0 + $0x8] sm:$0xf]
  %v42 = vld [vmem:[%s0 + $0xc] sm:$0xf]
  %v43 = vld [vmem:[%s0 + $0x10] sm:$0xf]
  %v44 = vld [vmem:[%s0 + $0x14] sm:$0xf]
  %v45 = vld [vmem:[%s0 + $0x18] sm:$0xf]
  %v46 = vld [vmem:[%s0 + $0x1c] sm:$0xf]
  %v47 = vld [vmem:[%s1] sm:$0x3]
  %v56 = vunpack.c.l.b16 %v39
  %v57 = vunpack.c.l.b16 %v40
  %v58 = vunpack.c.l.b16 %v41
  %v59 = vunpack.c.l.b16 %v42
  %v60 = vunpack.c.l.b16 %v43
  %v61 = vunpack.c.l.b16 %v44
  %v62 = vunpack.c.l.b16 %v45
  %v63 = vunpack.c.l.b16 %v46
  %v64 = vpack.c.b16 %v57, %v56
  %v65 = vpack.c.b16 %v59, %v58
  %v66 = vpack.c.b16 %v61, %v60
  %v67 = vpack.c.b16 %v63, %v62
  %vm68 = vcmask 31744
  %v70 = vsel %vm68, %v64, 0
  %v73 = vsel %vm68, %v65, 0
  %v76 = vsel %vm68, %v66, 0
  %v79 = vsel %vm68, %v67, 0
  %vm81 = vcmask 1041408
  %v83 = vsel %vm81, %v47, 0
  %85 = vmatprep.subr.bf16.mxu0 0
  %86 = vmatpush1.bf16.msra.mxu0 0
  %87 = vmatprep.subr.bf16.mxu0 0
  %88 = vmatpush1.bf16.msra.mxu0 0
  %89 = vmatprep.subr.bf16.mxu0 0
  %90 = vmatpush1.bf16.msra.mxu0 0
  %91 = vmatprep.subr.bf16.mxu0 0
  %92 = vmatpush1.bf16.msra.mxu0 0
  %93 = vmatprep.subr.bf16.mxu0 0
  %94 = vmatpush1.bf16.msra.mxu0 0
  %95 = vmatprep.subr.bf16.mxu0 0
  %96 = vmatpush1.bf16.msra.mxu0 0
  %97 = vmatprep.subr.bf16.mxu0 0
  %98 = vmatpush1.bf16.msra.mxu0 0
  %99 = vmatprep.subr.bf16.mxu0 0
  %100 = vmatpush1.bf16.msra.mxu0 %v83
  %101 = vmatprep.subr.bf16.mxu0 0
  %102 = vmatpush2.bf16.msra.mxu0 0
  %103 = vmatprep.subr.bf16.mxu0 0
  %104 = vmatpush2.bf16.msra.mxu0 0
  %105 = vmatprep.subr.bf16.mxu0 0
  %106 = vmatpush2.bf16.msra.mxu0 0
  %107 = vmatprep.subr.bf16.mxu0 0
  %108 = vmatpush2.bf16.msra.mxu0 0
  %109 = vmatprep.subr.bf16.mxu0 0
  %110 = vmatpush2.bf16.msra.mxu0 0
  %111 = vmatprep.subr.bf16.mxu0 0
  %112 = vmatpush2.bf16.msra.mxu0 0
  %113 = vmatprep.subr.bf16.mxu0 0
  %114 = vmatpush2.bf16.msra.mxu0 0
  %115 = vmatprep.subr.bf16.mxu0 0
  %116 = vmatpush2.bf16.msra.mxu0 0
  %117 = vmatprep.mubr.bf16.mxu0 0
  %118 = vmatmul.mubr.bf16.gmra.mxu0 %v70
  %v119 = vpop.f32.mrf.mxu0
  %v120 = vadd.f32 0.0, %v119
  %v121 = vpop.f32.mrf.mxu0
  %v122 = vpop.f32.mrf.mxu0
  %v123 = vadd.f32 0.0, %v122
  %v124 = vpop.f32.mrf.mxu0
  %125 = vmatprep.mubr.bf16.mxu0 0
  %126 = vmatmul.mubr.bf16.gmra.mxu0 %v73
  %v127 = vpop.f32.mrf.mxu0
  %v128 = vadd.f32 0.0, %v127
  %v129 = vpop.f32.mrf.mxu0
  %v130 = vpop.f32.mrf.mxu0
  %v131 = vadd.f32 0.0, %v130
  %v132 = vpop.f32.mrf.mxu0
  %133 = vmatprep.mubr.bf16.mxu0 0
  %134 = vmatmul.mubr.bf16.gmra.mxu0 %v76
  %v135 = vpop.f32.mrf.mxu0
  %v136 = vadd.f32 0.0, %v135
  %v137 = vpop.f32.mrf.mxu0
  %v138 = vpop.f32.mrf.mxu0
  %v139 = vadd.f32 0.0, %v138
  %v140 = vpop.f32.mrf.mxu0
  %141 = vmatprep.mubr.bf16.mxu0 0
  %142 = vmatmul.mubr.bf16.gmra.mxu0 %v79
  %v143 = vpop.f32.mrf.mxu0
  %v144 = vadd.f32 0.0, %v143
  %v145 = vpop.f32.mrf.mxu0
  %v146 = vpop.f32.mrf.mxu0
  %v147 = vadd.f32 0.0, %v146
  %v148 = vpop.f32.mrf.mxu0
  %149 = vdwg.mxu0
  %v150 = vld [vmem:[%s2] sm:$0x1]
  %v152 = vlaneseq
  %v153 = vshrl.u32 %v152, 7
  %v154 = vsub.s32 0, %v153
  %v155 = vrot.slane %v150, %v154
  %v157 = vadd.f32 %v120, %v155
  %v158 = vadd.f32 %v123, %v155
  %v159 = vadd.f32 %v128, %v155
  %v160 = vadd.f32 %v131, %v155
  %v161 = vadd.f32 %v136, %v155
  %v162 = vadd.f32 %v139, %v155
  %v163 = vadd.f32 %v144, %v155
  %v164 = vadd.f32 %v147, %v155
  %165 = vst [vmem:[#allocation2] sm:$0xff] %v157
  %166 = vst [vmem:[#allocation2 + $0x8] sm:$0xff] %v158
  %167 = vst [vmem:[#allocation2 + $0x10] sm:$0xff] %v159
  %168 = vst [vmem:[#allocation2 + $0x18] sm:$0xff] %v160
  %169 = vst [vmem:[#allocation2 + $0x20] sm:$0xff] %v161
  %170 = vst [vmem:[#allocation2 + $0x28] sm:$0xff] %v162
  %171 = vst [vmem:[#allocation2 + $0x30] sm:$0xff] %v163
  %172 = vst [vmem:[#allocation2 + $0x38] sm:$0xff] %v164
  %v173 = vld [vmem:[#allocation3] sm:$0xff]
  %v174 = vld [vmem:[#allocation4] sm:$0xff]
  %v175 = vld [vmem:[#allocation2] sm:$0xff]
  %v176 = vpack.c.bf16 %v173, %v173
  %v177 = vld [vmem:[%s3] sm:$0xf]
  %v178 = vld [vmem:[%s3 + $0x4] sm:$0xf]
  %v179 = vld [vmem:[%s3 + $0x8] sm:$0xf]
  %v180 = vld [vmem:[%s3 + $0xc] sm:$0xf]
  %v185 = vunpack.c.l.b16 %v177
  %v186 = vunpack.c.l.b16 %v178
  %v187 = vunpack.c.l.b16 %v179
  %v188 = vunpack.c.l.b16 %v180
  %v189 = vpack.c.b16 %v186, %v185
  %v190 = vpack.c.b16 %v188, %v187
  %vm193 = vcmask 261120
  %v195 = vsel %vm193, %v176, 0
  %197 = vmatprep.subr.bf16.mxu0 0
  %198 = vmatpush1.bf16.msra.mxu0 0
  %199 = vmatprep.subr.bf16.mxu0 0
  %200 = vmatpush1.bf16.msra.mxu0 0
  %201 = vmatprep.subr.bf16.mxu0 0
  %202 = vmatpush1.bf16.msra.mxu0 0
  %203 = vmatprep.subr.bf16.mxu0 0
  %204 = vmatpush1.bf16.msra.mxu0 0
  %205 = vmatprep.subr.bf16.mxu0 0
  %206 = vmatpush1.bf16.msra.mxu0 0
  %207 = vmatprep.subr.bf16.mxu0 0
  %208 = vmatpush1.bf16.msra.mxu0 0
  %209 = vmatprep.subr.bf16.mxu0 0
  %210 = vmatpush1.bf16.msra.mxu0 %v190
  %211 = vmatprep.subr.bf16.mxu0 0
  %212 = vmatpush1.bf16.msra.mxu0 %v189
  %213 = vmatprep.subr.bf16.mxu0 0
  %214 = vmatpush2.bf16.msra.mxu0 0
  %215 = vmatprep.subr.bf16.mxu0 0
  %216 = vmatpush2.bf16.msra.mxu0 0
  %217 = vmatprep.subr.bf16.mxu0 0
  %218 = vmatpush2.bf16.msra.mxu0 0
  %219 = vmatprep.subr.bf16.mxu0 0
  %220 = vmatpush2.bf16.msra.mxu0 0
  %221 = vmatprep.subr.bf16.mxu0 0
  %222 = vmatpush2.bf16.msra.mxu0 0
  %223 = vmatprep.subr.bf16.mxu0 0
  %224 = vmatpush2.bf16.msra.mxu0 0
  %225 = vmatprep.subr.bf16.mxu0 0
  %226 = vmatpush2.bf16.msra.mxu0 0
  %227 = vmatprep.subr.bf16.mxu0 0
  %228 = vmatpush2.bf16.msra.mxu0 0
  %229 = vmatprep.mubr.bf16.mxu0 0
  %230 = vmatmul.mubr.bf16.gmra.mxu0 %v195
  %v231 = vpop.f32.mrf.mxu0
  %v232 = vadd.f32 0.0, %v231
  %v233 = vpop.f32.mrf.mxu0
  %v234 = vpop.f32.mrf.mxu0
  %v235 = vpop.f32.mrf.mxu0
  %236 = vdwg.mxu0
  %v237 = vadd.f32 %v175, %v232
  %v238 = vxor.u32 %v237, 2147483648
  %v239 = vmul.f32 %v238, 1.442695
  %v240 = vpow.pop %v239
  %v241 = vadd.f32 %v240, 1.0
  %v242 = vrcp.pop %v241
  %v243 = vmul.f32 1.0, %v242
  %v244 = vtanh.pop %v237
  %246 = vrot.lane.b32.xlu0 %v174, 32
  %v247 = vpop.permute.xlu0 %246
  %v249 = vmul.f32 %v243, %v247
  %251 = vrot.lane.b32.xlu0 %v244, 32
  %v252 = vpop.permute.xlu0 %251
  %v254 = vmul.f32 %v243, %v252
  %256 = vrot.lane.b32.xlu0 %v254, 32
  %v257 = vpop.permute.xlu0 %256
  %v259 = vadd.f32 %v249, %v257
  %v260 = vtanh.pop %v259
  %262 = vrot.lane.b32.xlu0 %v260, 32
  %v263 = vpop.permute.xlu0 %262
  %v265 = vmul.f32 %v243, %v263
  %s266 = scalar_lea.vmem [#allocation2], 8
  %v267 = vld [vmem:[%s266] sm:$0xff]
  %v268 = vpack.c.bf16 %v265, %v265
  %270 = vrot.lane.b32.xlu0 %v268, 64
  %v271 = vpop.permute.xlu0 %270
  %v273 = vsel %vm193, %v271, 0
  %275 = vmatprep.subr.bf16.mxu0 0
  %276 = vmatpush1.bf16.msra.mxu0 0
  %277 = vmatprep.subr.bf16.mxu0 0
  %278 = vmatpush1.bf16.msra.mxu0 0
  %279 = vmatprep.subr.bf16.mxu0 0
  %280 = vmatpush1.bf16.msra.mxu0 0
  %281 = vmatprep.subr.bf16.mxu0 0
  %282 = vmatpush1.bf16.msra.mxu0 0
  %283 = vmatprep.subr.bf16.mxu0 0
  %284 = vmatpush1.bf16.msra.mxu0 0
  %285 = vmatprep.subr.bf16.mxu0 0
  %286 = vmatpush1.bf16.msra.mxu0 0
  %287 = vmatprep.subr.bf16.mxu0 0
  %288 = vmatpush1.bf16.msra.mxu0 %v190
  %289 = vmatprep.subr.bf16.mxu0 0
  %290 = vmatpush1.bf16.msra.mxu0 %v189
  %291 = vmatprep.subr.bf16.mxu0 0
  %292 = vmatpush2.bf16.msra.mxu0 0
  %293 = vmatprep.subr.bf16.mxu0 0
  %294 = vmatpush2.bf16.msra.mxu0 0
  %295 = vmatprep.subr.bf16.mxu0 0
  %296 = vmatpush2.bf16.msra.mxu0 0
  %297 = vmatprep.subr.bf16.mxu0 0
  %298 = vmatpush2.bf16.msra.mxu0 0
  %299 = vmatprep.subr.bf16.mxu0 0
  %300 = vmatpush2.bf16.msra.mxu0 0
  %301 = vmatprep.subr.bf16.mxu0 0
  %302 = vmatpush2.bf16.msra.mxu0 0
  %303 = vmatprep.subr.bf16.mxu0 0
  %304 = vmatpush2.bf16.msra.mxu0 0
  %305 = vmatprep.subr.bf16.mxu0 0
  %306 = vmatpush2.bf16.msra.mxu0 0
  %307 = vmatprep.mubr.bf16.mxu0 0
  %308 = vmatmul.mubr.bf16.gmra.mxu0 %v273
  %v309 = vpop.f32.mrf.mxu0
  %v310 = vadd.f32 0.0, %v309
  %v311 = vpop.f32.mrf.mxu0
  %v312 = vpop.f32.mrf.mxu0
  %v313 = vpop.f32.mrf.mxu0
  %314 = vdwg.mxu0
  %v315 = vadd.f32 %v267, %v310
  %v316 = vxor.u32 %v315, 2147483648
  %v317 = vmul.f32 %v316, 1.442695
  %v318 = vpow.pop %v317
  %v319 = vadd.f32 %v318, 1.0
  %v320 = vrcp.pop %v319
  %v321 = vmul.f32 1.0, %v320
  %v322 = vtanh.pop %v315
  %v323 = vmul.f32 %v321, %v259
  %325 = vrot.lane.b32.xlu0 %v322, 32
  %v326 = vpop.permute.xlu0 %325
  %v328 = vmul.f32 %v321, %v326
  %330 = vrot.lane.b32.xlu0 %v328, 32
  %v331 = vpop.permute.xlu0 %330
  %v333 = vadd.f32 %v323, %v331
  %v334 = vtanh.pop %v333
  %336 = vrot.lane.b32.xlu0 %v334, 32
  %v337 = vpop.permute.xlu0 %336
  %v339 = vmul.f32 %v321, %v337
  %s340 = scalar_lea.vmem [#allocation2], 16
  %v341 = vld [vmem:[%s340] sm:$0xff]
  %v342 = vpack.c.bf16 %v339, %v339
  %344 = vrot.lane.b32.xlu0 %v342, 64
  %v345 = vpop.permute.xlu0 %344
  %v347 = vsel %vm193, %v345, 0
  %349 = vmatprep.subr.bf16.mxu0 0
  %350 = vmatpush1.bf16.msra.mxu0 0
  %351 = vmatprep.subr.bf16.mxu0 0
  %352 = vmatpush1.bf16.msra.mxu0 0
  %353 = vmatprep.subr.bf16.mxu0 0
  %354 = vmatpush1.bf16.msra.mxu0 0
  %355 = vmatprep.subr.bf16.mxu0 0
  %356 = vmatpush1.bf16.msra.mxu0 0
  %357 = vmatprep.subr.bf16.mxu0 0
  %358 = vmatpush1.bf16.msra.mxu0 0
  %359 = vmatprep.subr.bf16.mxu0 0
  %360 = vmatpush1.bf16.msra.mxu0 0
  %361 = vmatprep.subr.bf16.mxu0 0
  %362 = vmatpush1.bf16.msra.mxu0 %v190
  %363 = vmatprep.subr.bf16.mxu0 0
  %364 = vmatpush1.bf16.msra.mxu0 %v189
  %365 = vmatprep.subr.bf16.mxu0 0
  %366 = vmatpush2.bf16.msra.mxu0 0
  %367 = vmatprep.subr.bf16.mxu0 0
  %368 = vmatpush2.bf16.msra.mxu0 0
  %369 = vmatprep.subr.bf16.mxu0 0
  %370 = vmatpush2.bf16.msra.mxu0 0
  %371 = vmatprep.subr.bf16.mxu0 0
  %372 = vmatpush2.bf16.msra.mxu0 0
  %373 = vmatprep.subr.bf16.mxu0 0
  %374 = vmatpush2.bf16.msra.mxu0 0
  %375 = vmatprep.subr.bf16.mxu0 0
  %376 = vmatpush2.bf16.msra.mxu0 0
  %377 = vmatprep.subr.bf16.mxu0 0
  %378 = vmatpush2.bf16.msra.mxu0 0
  %379 = vmatprep.subr.bf16.mxu0 0
  %380 = vmatpush2.bf16.msra.mxu0 0
  %381 = vmatprep.mubr.bf16.mxu0 0
  %382 = vmatmul.mubr.bf16.gmra.mxu0 %v347
  %v383 = vpop.f32.mrf.mxu0
  %v384 = vadd.f32 0.0, %v383
  %v385 = vpop.f32.mrf.mxu0
  %v386 = vpop.f32.mrf.mxu0
  %v387 = vpop.f32.mrf.mxu0
  %388 = vdwg.mxu0
  %v389 = vadd.f32 %v341, %v384
  %v390 = vxor.u32 %v389, 2147483648
  %v391 = vmul.f32 %v390, 1.442695
  %v392 = vpow.pop %v391
  %v393 = vadd.f32 %v392, 1.0
  %v394 = vrcp.pop %v393
  %v395 = vmul.f32 1.0, %v394
  %v396 = vtanh.pop %v389
  %v397 = vmul.f32 %v395, %v333
  %399 = vrot.lane.b32.xlu0 %v396, 32
  %v400 = vpop.permute.xlu0 %399
  %v402 = vmul.f32 %v395, %v400
  %404 = vrot.lane.b32.xlu0 %v402, 32
  %v405 = vpop.permute.xlu0 %404
  %v407 = vadd.f32 %v397, %v405
  %v408 = vtanh.pop %v407
  %410 = vrot.lane.b32.xlu0 %v408, 32
  %v411 = vpop.permute.xlu0 %410
  %v413 = vmul.f32 %v395, %v411
  %s414 = scalar_lea.vmem [#allocation2], 24
  %v415 = vld [vmem:[%s414] sm:$0xff]
  %v416 = vpack.c.bf16 %v413, %v413
  %418 = vrot.lane.b32.xlu0 %v416, 64
  %v419 = vpop.permute.xlu0 %418
  %v421 = vsel %vm193, %v419, 0
  %423 = vmatprep.subr.bf16.mxu0 0
  %424 = vmatpush1.bf16.msra.mxu0 0
  %425 = vmatprep.subr.bf16.mxu0 0
  %426 = vmatpush1.bf16.msra.mxu0 0
  %427 = vmatprep.subr.bf16.mxu0 0
  %428 = vmatpush1.bf16.msra.mxu0 0
  %429 = vmatprep.subr.bf16.mxu0 0
  %430 = vmatpush1.bf16.msra.mxu0 0
  %431 = vmatprep.subr.bf16.mxu0 0
  %432 = vmatpush1.bf16.msra.mxu0 0
  %433 = vmatprep.subr.bf16.mxu0 0
  %434 = vmatpush1.bf16.msra.mxu0 0
  %435 = vmatprep.subr.bf16.mxu0 0
  %436 = vmatpush1.bf16.msra.mxu0 %v190
  %437 = vmatprep.subr.bf16.mxu0 0
  %438 = vmatpush1.bf16.msra.mxu0 %v189
  %439 = vmatprep.subr.bf16.mxu0 0
  %440 = vmatpush2.bf16.msra.mxu0 0
  %441 = vmatprep.subr.bf16.mxu0 0
  %442 = vmatpush2.bf16.msra.mxu0 0
  %443 = vmatprep.subr.bf16.mxu0 0
  %444 = vmatpush2.bf16.msra.mxu0 0
  %445 = vmatprep.subr.bf16.mxu0 0
  %446 = vmatpush2.bf16.msra.mxu0 0
  %447 = vmatprep.subr.bf16.mxu0 0
  %448 = vmatpush2.bf16.msra.mxu0 0
  %449 = vmatprep.subr.bf16.mxu0 0
  %450 = vmatpush2.bf16.msra.mxu0 0
  %451 = vmatprep.subr.bf16.mxu0 0
  %452 = vmatpush2.bf16.msra.mxu0 0
  %453 = vmatprep.subr.bf16.mxu0 0
  %454 = vmatpush2.bf16.msra.mxu0 0
  %455 = vmatprep.mubr.bf16.mxu0 0
  %456 = vmatmul.mubr.bf16.gmra.mxu0 %v421
  %v457 = vpop.f32.mrf.mxu0
  %v458 = vadd.f32 0.0, %v457
  %v459 = vpop.f32.mrf.mxu0
  %v460 = vpop.f32.mrf.mxu0
  %v461 = vpop.f32.mrf.mxu0
  %462 = vdwg.mxu0
  %v463 = vadd.f32 %v415, %v458
  %v464 = vxor.u32 %v463, 2147483648
  %v465 = vmul.f32 %v464, 1.442695
  %v466 = vpow.pop %v465
  %v467 = vadd.f32 %v466, 1.0
  %v468 = vrcp.pop %v467
  %v469 = vmul.f32 1.0, %v468
  %v470 = vtanh.pop %v463
  %v471 = vmul.f32 %v469, %v407
  %473 = vrot.lane.b32.xlu0 %v470, 32
  %v474 = vpop.permute.xlu0 %473
  %v476 = vmul.f32 %v469, %v474
  %478 = vrot.lane.b32.xlu0 %v476, 32
  %v479 = vpop.permute.xlu0 %478
  %v481 = vadd.f32 %v471, %v479
  %v482 = vtanh.pop %v481
  %484 = vrot.lane.b32.xlu0 %v482, 32
  %v485 = vpop.permute.xlu0 %484
  %v487 = vmul.f32 %v469, %v485
  %s488 = scalar_lea.vmem [#allocation2], 32
  %v489 = vld [vmem:[%s488] sm:$0xff]
  %v490 = vpack.c.bf16 %v487, %v487
  %492 = vrot.lane.b32.xlu0 %v490, 64
  %v493 = vpop.permute.xlu0 %492
  %v495 = vsel %vm193, %v493, 0
  %497 = vmatprep.subr.bf16.mxu0 0
  %498 = vmatpush1.bf16.msra.mxu0 0
  %499 = vmatprep.subr.bf16.mxu0 0
  %500 = vmatpush1.bf16.msra.mxu0 0
  %501 = vmatprep.subr.bf16.mxu0 0
  %502 = vmatpush1.bf16.msra.mxu0 0
  %503 = vmatprep.subr.bf16.mxu0 0
  %504 = vmatpush1.bf16.msra.mxu0 0
  %505 = vmatprep.subr.bf16.mxu0 0
  %506 = vmatpush1.bf16.msra.mxu0 0
  %507 = vmatprep.subr.bf16.mxu0 0
  %508 = vmatpush1.bf16.msra.mxu0 0
  %509 = vmatprep.subr.bf16.mxu0 0
  %510 = vmatpush1.bf16.msra.mxu0 %v190
  %511 = vmatprep.subr.bf16.mxu0 0
  %512 = vmatpush1.bf16.msra.mxu0 %v189
  %513 = vmatprep.subr.bf16.mxu0 0
  %514 = vmatpush2.bf16.msra.mxu0 0
  %515 = vmatprep.subr.bf16.mxu0 0
  %516 = vmatpush2.bf16.msra.mxu0 0
  %517 = vmatprep.subr.bf16.mxu0 0
  %518 = vmatpush2.bf16.msra.mxu0 0
  %519 = vmatprep.subr.bf16.mxu0 0
  %520 = vmatpush2.bf16.msra.mxu0 0
  %521 = vmatprep.subr.bf16.mxu0 0
  %522 = vmatpush2.bf16.msra.mxu0 0
  %523 = vmatprep.subr.bf16.mxu0 0
  %524 = vmatpush2.bf16.msra.mxu0 0
  %525 = vmatprep.subr.bf16.mxu0 0
  %526 = vmatpush2.bf16.msra.mxu0 0
  %527 = vmatprep.subr.bf16.mxu0 0
  %528 = vmatpush2.bf16.msra.mxu0 0
  %529 = vmatprep.mubr.bf16.mxu0 0
  %530 = vmatmul.mubr.bf16.gmra.mxu0 %v495
  %v531 = vpop.f32.mrf.mxu0
  %v532 = vadd.f32 0.0, %v531
  %v533 = vpop.f32.mrf.mxu0
  %v534 = vpop.f32.mrf.mxu0
  %v535 = vpop.f32.mrf.mxu0
  %536 = vdwg.mxu0
  %v537 = vadd.f32 %v489, %v532
  %v538 = vxor.u32 %v537, 2147483648
  %v539 = vmul.f32 %v538, 1.442695
  %v540 = vpow.pop %v539
  %v541 = vadd.f32 %v540, 1.0
  %v542 = vrcp.pop %v541
  %v543 = vmul.f32 1.0, %v542
  %v544 = vtanh.pop %v537
  %v545 = vmul.f32 %v543, %v481
  %547 = vrot.lane.b32.xlu0 %v544, 32
  %v548 = vpop.permute.xlu0 %547
  %v550 = vmul.f32 %v543, %v548
  %552 = vrot.lane.b32.xlu0 %v550, 32
  %v553 = vpop.permute.xlu0 %552
  %v555 = vadd.f32 %v545, %v553
  %v556 = vtanh.pop %v555
  %558 = vrot.lane.b32.xlu0 %v556, 32
  %v559 = vpop.permute.xlu0 %558
  %v561 = vmul.f32 %v543, %v559
  %s562 = scalar_lea.vmem [#allocation2], 40
  %v563 = vld [vmem:[%s562] sm:$0xff]
  %v564 = vpack.c.bf16 %v561, %v561
  %566 = vrot.lane.b32.xlu0 %v564, 64
  %v567 = vpop.permute.xlu0 %566
  %v569 = vsel %vm193, %v567, 0
  %571 = vmatprep.subr.bf16.mxu0 0
  %572 = vmatpush1.bf16.msra.mxu0 0
  %573 = vmatprep.subr.bf16.mxu0 0
  %574 = vmatpush1.bf16.msra.mxu0 0
  %575 = vmatprep.subr.bf16.mxu0 0
  %576 = vmatpush1.bf16.msra.mxu0 0
  %577 = vmatprep.subr.bf16.mxu0 0
  %578 = vmatpush1.bf16.msra.mxu0 0
  %579 = vmatprep.subr.bf16.mxu0 0
  %580 = vmatpush1.bf16.msra.mxu0 0
  %581 = vmatprep.subr.bf16.mxu0 0
  %582 = vmatpush1.bf16.msra.mxu0 0
  %583 = vmatprep.subr.bf16.mxu0 0
  %584 = vmatpush1.bf16.msra.mxu0 %v190
  %585 = vmatprep.subr.bf16.mxu0 0
  %586 = vmatpush1.bf16.msra.mxu0 %v189
  %587 = vmatprep.subr.bf16.mxu0 0
  %588 = vmatpush2.bf16.msra.mxu0 0
  %589 = vmatprep.subr.bf16.mxu0 0
  %590 = vmatpush2.bf16.msra.mxu0 0
  %591 = vmatprep.subr.bf16.mxu0 0
  %592 = vmatpush2.bf16.msra.mxu0 0
  %593 = vmatprep.subr.bf16.mxu0 0
  %594 = vmatpush2.bf16.msra.mxu0 0
  %595 = vmatprep.subr.bf16.mxu0 0
  %596 = vmatpush2.bf16.msra.mxu0 0
  %597 = vmatprep.subr.bf16.mxu0 0
  %598 = vmatpush2.bf16.msra.mxu0 0
  %599 = vmatprep.subr.bf16.mxu0 0
  %600 = vmatpush2.bf16.msra.mxu0 0
  %601 = vmatprep.subr.bf16.mxu0 0
  %602 = vmatpush2.bf16.msra.mxu0 0
  %603 = vmatprep.mubr.bf16.mxu0 0
  %604 = vmatmul.mubr.bf16.gmra.mxu0 %v569
  %v605 = vpop.f32.mrf.mxu0
  %v606 = vadd.f32 0.0, %v605
  %v607 = vpop.f32.mrf.mxu0
  %v608 = vpop.f32.mrf.mxu0
  %v609 = vpop.f32.mrf.mxu0
  %610 = vdwg.mxu0
  %v611 = vadd.f32 %v563, %v606
  %v612 = vxor.u32 %v611, 2147483648
  %v613 = vmul.f32 %v612, 1.442695
  %v614 = vpow.pop %v613
  %v615 = vadd.f32 %v614, 1.0
  %v616 = vrcp.pop %v615
  %v617 = vmul.f32 1.0, %v616
  %v618 = vtanh.pop %v611
  %v619 = vmul.f32 %v617, %v555
  %621 = vrot.lane.b32.xlu0 %v618, 32
  %v622 = vpop.permute.xlu0 %621
  %v624 = vmul.f32 %v617, %v622
  %626 = vrot.lane.b32.xlu0 %v624, 32
  %v627 = vpop.permute.xlu0 %626
  %v629 = vadd.f32 %v619, %v627
  %v630 = vtanh.pop %v629
  %632 = vrot.lane.b32.xlu0 %v630, 32
  %v633 = vpop.permute.xlu0 %632
  %v635 = vmul.f32 %v617, %v633
  %s636 = scalar_lea.vmem [#allocation2], 48
  %v637 = vld [vmem:[%s636] sm:$0xff]
  %v638 = vpack.c.bf16 %v635, %v635
  %640 = vrot.lane.b32.xlu0 %v638, 64
  %v641 = vpop.permute.xlu0 %640
  %v643 = vsel %vm193, %v641, 0
  %645 = vmatprep.subr.bf16.mxu0 0
  %646 = vmatpush1.bf16.msra.mxu0 0
  %647 = vmatprep.subr.bf16.mxu0 0
  %648 = vmatpush1.bf16.msra.mxu0 0
  %649 = vmatprep.subr.bf16.mxu0 0
  %650 = vmatpush1.bf16.msra.mxu0 0
  %651 = vmatprep.subr.bf16.mxu0 0
  %652 = vmatpush1.bf16.msra.mxu0 0
  %653 = vmatprep.subr.bf16.mxu0 0
  %654 = vmatpush1.bf16.msra.mxu0 0
  %655 = vmatprep.subr.bf16.mxu0 0
  %656 = vmatpush1.bf16.msra.mxu0 0
  %657 = vmatprep.subr.bf16.mxu0 0
  %658 = vmatpush1.bf16.msra.mxu0 %v190
  %659 = vmatprep.subr.bf16.mxu0 0
  %660 = vmatpush1.bf16.msra.mxu0 %v189
  %661 = vmatprep.subr.bf16.mxu0 0
  %662 = vmatpush2.bf16.msra.mxu0 0
  %663 = vmatprep.subr.bf16.mxu0 0
  %664 = vmatpush2.bf16.msra.mxu0 0
  %665 = vmatprep.subr.bf16.mxu0 0
  %666 = vmatpush2.bf16.msra.mxu0 0
  %667 = vmatprep.subr.bf16.mxu0 0
  %668 = vmatpush2.bf16.msra.mxu0 0
  %669 = vmatprep.subr.bf16.mxu0 0
  %670 = vmatpush2.bf16.msra.mxu0 0
  %671 = vmatprep.subr.bf16.mxu0 0
  %672 = vmatpush2.bf16.msra.mxu0 0
  %673 = vmatprep.subr.bf16.mxu0 0
  %674 = vmatpush2.bf16.msra.mxu0 0
  %675 = vmatprep.subr.bf16.mxu0 0
  %676 = vmatpush2.bf16.msra.mxu0 0
  %677 = vmatprep.mubr.bf16.mxu0 0
  %678 = vmatmul.mubr.bf16.gmra.mxu0 %v643
  %v679 = vpop.f32.mrf.mxu0
  %v680 = vadd.f32 0.0, %v679
  %v681 = vpop.f32.mrf.mxu0
  %v682 = vpop.f32.mrf.mxu0
  %v683 = vpop.f32.mrf.mxu0
  %684 = vdwg.mxu0
  %v685 = vadd.f32 %v637, %v680
  %v686 = vxor.u32 %v685, 2147483648
  %v687 = vmul.f32 %v686, 1.442695
  %v688 = vpow.pop %v687
  %v689 = vadd.f32 %v688, 1.0
  %v690 = vrcp.pop %v689
  %v691 = vmul.f32 1.0, %v690
  %v692 = vtanh.pop %v685
  %v693 = vmul.f32 %v691, %v629
  %695 = vrot.lane.b32.xlu0 %v692, 32
  %v696 = vpop.permute.xlu0 %695
  %v698 = vmul.f32 %v691, %v696
  %700 = vrot.lane.b32.xlu0 %v698, 32
  %v701 = vpop.permute.xlu0 %700
  %v703 = vadd.f32 %v693, %v701
  %v704 = vtanh.pop %v703
  %706 = vrot.lane.b32.xlu0 %v704, 32
  %v707 = vpop.permute.xlu0 %706
  %v709 = vmul.f32 %v691, %v707
  %s710 = scalar_lea.vmem [#allocation2], 56
  %v711 = vld [vmem:[%s710] sm:$0xff]
  %v712 = vpack.c.bf16 %v709, %v709
  %714 = vrot.lane.b32.xlu0 %v712, 64
  %v715 = vpop.permute.xlu0 %714
  %v717 = vsel %vm193, %v715, 0
  %719 = vmatprep.subr.bf16.mxu0 0
  %720 = vmatpush1.bf16.msra.mxu0 0
  %721 = vmatprep.subr.bf16.mxu0 0
  %722 = vmatpush1.bf16.msra.mxu0 0
  %723 = vmatprep.subr.bf16.mxu0 0
  %724 = vmatpush1.bf16.msra.mxu0 0
  %725 = vmatprep.subr.bf16.mxu0 0
  %726 = vmatpush1.bf16.msra.mxu0 0
  %727 = vmatprep.subr.bf16.mxu0 0
  %728 = vmatpush1.bf16.msra.mxu0 0
  %729 = vmatprep.subr.bf16.mxu0 0
  %730 = vmatpush1.bf16.msra.mxu0 0
  %731 = vmatprep.subr.bf16.mxu0 0
  %732 = vmatpush1.bf16.msra.mxu0 %v190
  %733 = vmatprep.subr.bf16.mxu0 0
  %734 = vmatpush1.bf16.msra.mxu0 %v189
  %735 = vmatprep.subr.bf16.mxu0 0
  %736 = vmatpush2.bf16.msra.mxu0 0
  %737 = vmatprep.subr.bf16.mxu0 0
  %738 = vmatpush2.bf16.msra.mxu0 0
  %739 = vmatprep.subr.bf16.mxu0 0
  %740 = vmatpush2.bf16.msra.mxu0 0
  %741 = vmatprep.subr.bf16.mxu0 0
  %742 = vmatpush2.bf16.msra.mxu0 0
  %743 = vmatprep.subr.bf16.mxu0 0
  %744 = vmatpush2.bf16.msra.mxu0 0
  %745 = vmatprep.subr.bf16.mxu0 0
  %746 = vmatpush2.bf16.msra.mxu0 0
  %747 = vmatprep.subr.bf16.mxu0 0
  %748 = vmatpush2.bf16.msra.mxu0 0
  %749 = vmatprep.subr.bf16.mxu0 0
  %750 = vmatpush2.bf16.msra.mxu0 0
  %751 = vmatprep.mubr.bf16.mxu0 0
  %752 = vmatmul.mubr.bf16.gmra.mxu0 %v717
  %v753 = vpop.f32.mrf.mxu0
  %v754 = vadd.f32 0.0, %v753
  %v755 = vpop.f32.mrf.mxu0
  %v756 = vpop.f32.mrf.mxu0
  %v757 = vpop.f32.mrf.mxu0
  %758 = vdwg.mxu0
  %v759 = vadd.f32 %v711, %v754
  %v760 = vxor.u32 %v759, 2147483648
  %v761 = vmul.f32 %v760, 1.442695
  %v762 = vpow.pop %v761
  %v763 = vadd.f32 %v762, 1.0
  %v764 = vrcp.pop %v763
  %v765 = vmul.f32 1.0, %v764
  %v766 = vtanh.pop %v759
  %v767 = vmul.f32 %v765, %v703
  %769 = vrot.lane.b32.xlu0 %v766, 32
  %v770 = vpop.permute.xlu0 %769
  %v772 = vmul.f32 %v765, %v770
  %774 = vrot.lane.b32.xlu0 %v772, 32
  %v775 = vpop.permute.xlu0 %774
  %v777 = vadd.f32 %v767, %v775
  %v778 = vtanh.pop %v777
  %780 = vrot.lane.b32.xlu0 %v778, 32
  %v781 = vpop.permute.xlu0 %780
  %v783 = vmul.f32 %v765, %v781
  %785 = vrot.lane.b32.xlu0 %v783, 64
  %v786 = vpop.permute.xlu0 %785
  %788 = vst.msk [vmem:[#allocation3] sm:$0xff] %vm193, %v786
  %790 = vrot.lane.b32.xlu0 %v777, 96
  %v791 = vpop.permute.xlu0 %790
  %793 = vst.msk [vmem:[#allocation4] sm:$0xff] %vm193, %v791
  // Predicated region
  $region38: #{lstm_forward.1} parent=0 // pred_check
    %p794 = pneg %p32
  $region39: #{lstm_forward.1} parent=0 // pred_check_branch
    %796 = sbr.rel (%p794) target = $region41
  $region40: #{lstm_forward.1} parent=0 // pred_region
    %v797 = vsel %vm193, %v786, 0.0
    %798 = vadd.xlane.f32.xlu0 %v797
    %v799 = vpop.xlane.xlu0 %798
    %v800 = vrcp.pop 32.0
    %v801 = vmul.f32 %v799, %v800
    %v802 = vsub.f32 %v783, %v801
    %v803 = vmul.f32 %v802, %v802
    %805 = vrot.lane.b32.xlu0 %v803, 64
    %v806 = vpop.permute.xlu0 %805
    %v808 = vsel %vm193, %v806, 0.0
    %809 = vadd.xlane.f32.xlu0 %v808
    %v810 = vpop.xlane.xlu0 %809
    %v811 = vmul.f32 %v810, %v800
    %v812 = vadd.f32 %v811, 1e-05
    %v813 = vrsqrt.pop %v812
    %v814 = vmul.f32 %v802, %v813
    %v815 = vld [vmem:[%s4] sm:$0x1]
    %v817 = vlaneseq
    %v818 = vshrl.u32 %v817, 7
    %v819 = vsub.s32 0, %v818
    %v820 = vrot.slane %v815, %v819
    %821 = vrot.lane.b32.xlu0 %v820, 64
    %v822 = vpop.permute.xlu0 %821
    %v824 = vmul.f32 %v814, %v822
    %v825 = vld [vmem:[%s5] sm:$0x1]
    %v827 = vlaneseq
    %v828 = vshrl.u32 %v827, 7
    %v829 = vsub.s32 0, %v828
    %v830 = vrot.slane %v825, %v829
    %831 = vrot.lane.b32.xlu0 %v830, 64
    %v832 = vpop.permute.xlu0 %831
    %v834 = vadd.f32 %v824, %v832
    %v835 = vld [vmem:[%s6] sm:$0x1]
    %v837 = vlaneseq
    %v838 = vshrl.u32 %v837, 7
    %v839 = vsub.s32 0, %v838
    %v840 = vrot.slane %v835, %v839
    %841 = vrot.lane.b32.xlu0 %v840, 64
    %v842 = vpop.permute.xlu0 %841
    %v844 = vmul.f32 %v834, %v842
    %846 = vrot.lane.b32.xlu0 %v844, 64
    %v847 = vpop.permute.xlu0 %846
    %v849 = vsel %vm193, %v847, 0.0
    %850 = vadd.xlane.f32.xlu0 %v849
    %v851 = vpop.xlane.xlu0 %850
    %v852 = vld [vmem:[#allocation5] sm:$0x1]
    %v854 = vlaneseq
    %v855 = vshrl.u32 %v854, 7
    %v856 = vsub.s32 0, %v855
    %v857 = vrot.slane %v852, %v856
    %v859 = vadd.f32 %v851, %v857
    %vm860 = vcmask 7168
    %861 = vst.msk [vmem:[%s8] sm:$0xff] %vm860, %v859
  $region41: #{lstm_forward.1} parent=0 // pred_fallthru
    _
  // Predicated region
  $region42: #{lstm_forward.1} parent=0 // pred_check
    _
  $region43: #{lstm_forward.1} parent=0 // pred_check_branch
    %863 = sbr.rel (0) target = $region45
  $region44: #{lstm_forward.1} parent=0 // pred_region
    _
  $region45: #{lstm_forward.1} parent=0 // pred_fallthru
    _
  // Predicated region
  $region46: #{lstm_forward.1} parent=0 // pred_check
    _
  $region47: #{lstm_forward.1} parent=0 // pred_check_branch
    %865 = sbr.rel (0) target = $region49
  $region48: #{lstm_forward.1} parent=0 // pred_region
    _
  $region49: #{lstm_forward.1} parent=0 // pred_fallthru
    _

</llo_original>
